<compile_context>
chip_gen: v6e
topology: v6e:2x2x1
jax: 0.10.0
libtpu: 0.0.40
codegen_flags: <defaults>
</compile_context>

<pallas_src>
import jax
import jax.numpy as jnp
from jax.experimental import pallas as pl
from jax.experimental.pallas import tpu as pltpu


def _flat_kernel(x_ref, w_ref, o_ref):
    """Single-step path: x_ref / w_ref / o_ref are (K, I*J), lane-dense."""
    o_ref[...] = x_ref[...] * w_ref[...]


def _tiled_kernel(x_ref, w_ref, o_ref):
    """General path: x_ref (1, TI, J), w_ref (1, TI, 1), o_ref (1, TI, J)."""
    o_ref[...] = x_ref[...] * w_ref[...]


# Per-array cap for the single-step (everything resident in VMEM) path.
_FLAT_PATH_MAX_BYTES = 4 << 20
# Budget for double-buffered x+out tiles on the tiled path; fits the 16 MiB
# scoped-VMEM default on v5e (and the larger defaults on v6e/v7x).
_TILE_VMEM_BUDGET = 8 << 20


def weight_forward(x, weight):
    """out[k, i, j] = x[k, i, j] * weight[k, i]."""
    K, I, J = x.shape
    assert weight.shape == (K, I), (weight.shape, (K, I))
    itemsize = jnp.dtype(x.dtype).itemsize
    nbytes = K * I * J * itemsize

    cost = pl.CostEstimate(
        flops=K * I * J,                 # one multiply per element
        transcendentals=0,
        bytes_accessed=2 * nbytes + K * I * itemsize,
    )

    IJ = I * J
    if IJ % 128 == 0 and nbytes <= _FLAT_PATH_MAX_BYTES:
        # Small-shape path: one grid step, lane-dense (K, I*J) layout.
        x_flat = x.reshape(K, IJ)
        # Expanding weight here is negligible at this size; the large-shape
        # path below avoids this expansion on purpose.
        w_flat = jnp.broadcast_to(weight[:, :, None], (K, I, J)).reshape(K, IJ)
        out_flat = pl.pallas_call(
            _flat_kernel,
            out_shape=jax.ShapeDtypeStruct((K, IJ), x.dtype),
            in_specs=[
                pl.BlockSpec((K, IJ), lambda: (0, 0)),
                pl.BlockSpec((K, IJ), lambda: (0, 0)),
            ],
            out_specs=pl.BlockSpec((K, IJ), lambda: (0, 0)),
            cost_estimate=cost,
        )(x_flat, w_flat)
        return out_flat.reshape(K, I, J)

    # General / large-shape fallback: tile I, keep the (TI, 1) lane broadcast
    # (no weight expansion -> no extra HBM traffic on a BW-bound kernel).
    j_padded = ((max(J, 128) + 127) // 128) * 128      # lane padding in VMEM
    bytes_per_row = 2 * 2 * j_padded * itemsize        # x + out, double-buffered
    ti = max(8, (_TILE_VMEM_BUDGET // bytes_per_row) // 8 * 8)
    ti = min(ti, ((I + 7) // 8) * 8)

    w3 = weight.reshape(K, I, 1)
    grid = (K, pl.cdiv(I, ti))
    return pl.pallas_call(
        _tiled_kernel,
        out_shape=jax.ShapeDtypeStruct((K, I, J), x.dtype),
        grid_spec=pltpu.PrefetchScalarGridSpec(
            num_scalar_prefetch=0,
            grid=grid,
            in_specs=[
                pl.BlockSpec((1, ti, J), lambda k, i: (k, i, 0)),
                pl.BlockSpec((1, ti, 1), lambda k, i: (k, i, 0)),
            ],
            out_specs=pl.BlockSpec((1, ti, J), lambda k, i: (k, i, 0)),
        ),
        compiler_params=pltpu.CompilerParams(
            dimension_semantics=("parallel", "parallel"),
        ),
        cost_estimate=cost,
    )(x, w3)


def _reference(x, weight):
    """Pure-JAX reference mirroring the PyTorch forward."""
    return jnp.einsum("kij,ki->kij", x, weight)


if __name__ == "__main__":
    # Shapes consistent with the module: K=2 (hard-coded in the buffer),
    # output_nodes=16, so x is the (2, 16, 16) adjacency stack it scales.
    K, NODES = 2, 16

    key = jax.random.PRNGKey(0)
    kx, kw = jax.random.split(key, 2)

    x = jax.random.normal(kx, (K, NODES, NODES), dtype=jnp.float32)
    # Mirrors self.weight.data.uniform_(-1, 1)
    weight = jax.random.uniform(
        kw, (K, NODES), dtype=jnp.float32, minval=-1.0, maxval=1.0)

    out = jax.jit(weight_forward)(x, weight)
    out = jax.block_until_ready(out)

    ref = _reference(x, weight)
    assert out.shape == (K, NODES, NODES), out.shape
    assert jnp.allclose(out, ref, atol=1e-6, rtol=1e-6), "mismatch vs reference"

    print("KERNEL_OK")
</pallas_src>

<mosaic_0001>
module attributes {stable_mosaic.version = 11 : i64} {
  func.func @_flat_kernel(%arg0: memref<2x256xf32, #tpu.memory_space<vmem>>, %arg1: memref<2x256xf32, #tpu.memory_space<vmem>>, %arg2: memref<2x256xf32, #tpu.memory_space<vmem>>) attributes {dimension_semantics = [], scalar_prefetch = 0 : i64, scratch_operands = 0 : i64, tpu.core_type = #tpu.core_type<tc>} {
    %c0 = arith.constant 0 : index
    %c0_0 = arith.constant 0 : index
    %0 = vector.load %arg0[%c0, %c0_0] : memref<2x256xf32, #tpu.memory_space<vmem>>, vector<2x256xf32>
    %c0_1 = arith.constant 0 : index
    %c0_2 = arith.constant 0 : index
    %1 = vector.load %arg1[%c0_1, %c0_2] : memref<2x256xf32, #tpu.memory_space<vmem>>, vector<2x256xf32>
    %2 = arith.mulf %0, %1 : vector<2x256xf32>
    %c0_3 = arith.constant 0 : index
    %c0_4 = arith.constant 0 : index
    %3 = vector.load %arg2[%c0_3, %c0_4] : memref<2x256xf32, #tpu.memory_space<vmem>>, vector<2x256xf32>
    tpu.vector_store %arg2[%c0_3, %c0_4], %2 {strides = array<i32>} : memref<2x256xf32, #tpu.memory_space<vmem>>, vector<2x256xf32>,
    return
  }
}

</mosaic_0001>

<llo_original>
// kernel: weight_forward.1
$region0: #{weight_forward.1}
  #allocation0 [shape = 'u32[]', space=smem, size = 0x4, offset = 0x4, fixed_abs, tag = 'smem constant byte address 0x4 - core index']
  #allocation1 [shape = 'u32[144,128]{1,0:T(1,128)}', space=vmem, size = 0x12000, scoped, tag = 'internal scratch']
  %s0 = inlined_call_operand.vmem [shape: f32[2,256], index: 0, kind: input, shape index: {}]
  %s1 = inlined_call_operand.vmem [shape: f32[2,256], index: 1, kind: input, shape index: {}]
  %s2 = inlined_call_operand.vmem [shape: f32[2,256], index: 2, kind: output, shape index: {}]
  %s3 = sld [smem:[#allocation0]]
  $region18: #{weight_forward.1} parent=0
    _
  %s5 = ssub.s32 1, %s3
  %s6 = scalar_select 0, %s5, %s3
  // Predicated region
  $region2: #{weight_forward.1} parent=0 // pred_check
    _
  $region3: #{weight_forward.1} parent=0 // pred_check_branch
    %8 = sbr.rel (0) target = $region5
  $region4: #{weight_forward.1} parent=0 // pred_region
    _
  $region5: #{weight_forward.1} parent=0 // pred_fallthru
    _
  // Predicated region
  $region6: #{weight_forward.1} parent=0 // pred_check
    _
  $region7: #{weight_forward.1} parent=0 // pred_check_branch
    %10 = sbr.rel (0) target = $region9
  $region8: #{weight_forward.1} parent=0 // pred_region
    _
  $region9: #{weight_forward.1} parent=0 // pred_fallthru
    _
  %v11 = vld [vmem:[%s0] sm:$0xf]
  %v12 = vld [vmem:[%s1] sm:$0xf]
  %v13 = vmul.f32 %v11, %v12
  %14 = vst [vmem:[%s2] sm:$0xf] %v13
  // Predicated region
  $region10: #{weight_forward.1} parent=0 // pred_check
    _
  $region11: #{weight_forward.1} parent=0 // pred_check_branch
    %16 = sbr.rel (0) target = $region13
  $region12: #{weight_forward.1} parent=0 // pred_region
    _
  $region13: #{weight_forward.1} parent=0 // pred_fallthru
    _
  // Predicated region
  $region14: #{weight_forward.1} parent=0 // pred_check
    _
  $region15: #{weight_forward.1} parent=0 // pred_check_branch
    %18 = sbr.rel (0) target = $region17
  $region16: #{weight_forward.1} parent=0 // pred_region
    _
  $region17: #{weight_forward.1} parent=0 // pred_fallthru
    _

</llo_original>
